<compile_context>
chip_gen: v5e
topology: v5e:2x2
jax: 0.10.0
libtpu: 0.0.40
codegen_flags: <defaults>
</compile_context>

<pallas_src>
import functools

import jax
import jax.numpy as jnp
from jax.experimental import pallas as pl
from jax.experimental.pallas import tpu as pltpu

_LANES = 128
_MAX_BLOCK_ROWS = 4096   # 4096x128 f32 = 2 MiB / input / buffer
_NUM_CORES = 2           # dual-TC split for v7x; harmless no-op on v5e/v6e


def _charbonnier_kernel(x_ref, y_ref, out_ref, *, eps2, rows, block_rows,
                        blocks_total, blocks_per_core):
    p = pl.program_id(0)          # parallel (core) axis
    j = pl.program_id(1)          # sequential reduction axis
    block_idx = p * blocks_per_core + j

    # Output block (p, :, :) is resident across the whole j loop -> use it
    # directly as the per-core, per-lane f32 accumulator.
    @pl.when(j == 0)
    def _init():
        out_ref[...] = jnp.zeros_like(out_ref)

    x = x_ref[...].astype(jnp.float32)    # in-kernel upcast (no wrapper copy)
    y = y_ref[...].astype(jnp.float32)
    diff = x - y
    val = jnp.sqrt(diff * diff + jnp.float32(eps2))

    full_blocks = rows // block_rows      # blocks with no out-of-range rows

    # Hot path: fully valid block, no masking at all.
    @pl.when(block_idx < full_blocks)
    def _full():
        out_ref[...] += jnp.sum(val, axis=0, keepdims=True)[None]

    # Cold path: the single ragged last block (only emitted if it exists).
    if full_blocks < blocks_total:
        @pl.when(block_idx == full_blocks)
        def _ragged():
            row_ids = (jax.lax.broadcasted_iota(jnp.int32, val.shape, 0)
                       + block_idx * block_rows)
            masked = jnp.where(row_ids < rows, val, jnp.float32(0.0))
            out_ref[...] += jnp.sum(masked, axis=0, keepdims=True)[None]

    # Blocks with block_idx >= blocks_total (padding of the parallel split)
    # fall through both branches and contribute nothing.


@functools.partial(jax.jit, static_argnames=("eps",))
def charbonnier_loss(x, y, *, eps=1e-3):
    """Pallas TPU implementation of CharbonnierLoss.forward(x, y)."""
    assert x.shape == y.shape, "x and y must have the same shape"
    total = int(x.size)
    eps = float(eps)

    xf = x.reshape(-1)
    yf = y.reshape(-1)

    # Minimal tail pad to a multiple of 128 lanes; each padded zero adds
    # exactly eps to the sum, corrected below.
    pad = (-total) % _LANES
    if pad:
        xf = jnp.pad(xf, (0, pad))
        yf = jnp.pad(yf, (0, pad))

    rows = (total + pad) // _LANES
    xf = xf.reshape(rows, _LANES)
    yf = yf.reshape(rows, _LANES)

    # Full-extent block for small inputs (always a legal tile); otherwise big
    # 4096-row tiles with a masked ragged last block.
    block_rows = rows if rows <= _MAX_BLOCK_ROWS else _MAX_BLOCK_ROWS
    blocks_total = -(-rows // block_rows)
    blocks_per_core = -(-blocks_total // _NUM_CORES)
    grid = (_NUM_CORES, blocks_per_core)

    def in_map(p, j):
        idx = p * blocks_per_core + j
        # Clamp so "dead" programs past the end DMA a valid block; the kernel
        # skips their contribution.
        return (jnp.minimum(idx, blocks_total - 1), 0)

    kernel = functools.partial(
        _charbonnier_kernel,
        eps2=eps * eps,
        rows=rows,
        block_rows=block_rows,
        blocks_total=blocks_total,
        blocks_per_core=blocks_per_core,
    )

    partials = pl.pallas_call(
        kernel,
        out_shape=jax.ShapeDtypeStruct((_NUM_CORES, 1, _LANES), jnp.float32),
        grid_spec=pltpu.PrefetchScalarGridSpec(
            num_scalar_prefetch=0,
            grid=grid,
            in_specs=[
                pl.BlockSpec((block_rows, _LANES), in_map),
                pl.BlockSpec((block_rows, _LANES), in_map),
            ],
            out_specs=pl.BlockSpec((1, 1, _LANES), lambda p, j: (p, 0, 0)),
        ),
        compiler_params=pltpu.CompilerParams(
            dimension_semantics=("parallel", "arbitrary")),
    )(xf, yf)

    total_sum = jnp.sum(partials) - jnp.float32(pad * eps)
    return total_sum / jnp.float32(total)


if __name__ == "__main__":
    key = jax.random.PRNGKey(0)
    kx, ky = jax.random.split(key)

    # NCHW inputs, small shape (lane-aligned path: no pad, no copies)
    x = jax.random.normal(kx, (2, 4, 16, 16), dtype=jnp.float32)
    y = jax.random.normal(ky, (2, 4, 16, 16), dtype=jnp.float32)

    loss = jax.block_until_ready(charbonnier_loss(x, y, eps=1e-3))
    diff = x - y
    ref = jnp.mean(jnp.sqrt(diff * diff + 1e-3 * 1e-3))
    assert jnp.allclose(loss, ref, rtol=1e-5, atol=1e-6), (loss, ref)

    # Non-lane-aligned shape (exercises the eps-corrected tail-pad path)
    x2 = jax.random.normal(kx, (2, 3, 7, 9), dtype=jnp.float32)
    y2 = jax.random.normal(ky, (2, 3, 7, 9), dtype=jnp.float32)
    loss2 = jax.block_until_ready(charbonnier_loss(x2, y2, eps=1e-3))
    d2 = x2 - y2
    ref2 = jnp.mean(jnp.sqrt(d2 * d2 + 1e-3 * 1e-3))
    assert jnp.allclose(loss2, ref2, rtol=1e-5, atol=1e-6), (loss2, ref2)

    # Larger shape exercising the multi-block (ragged last block) path
    x3 = jax.random.normal(kx, (4, 8, 130, 129), dtype=jnp.float32)
    y3 = jax.random.normal(ky, (4, 8, 130, 129), dtype=jnp.float32)
    loss3 = jax.block_until_ready(charbonnier_loss(x3, y3, eps=1e-3))
    d3 = x3 - y3
    ref3 = jnp.mean(jnp.sqrt(d3 * d3 + 1e-3 * 1e-3))
    assert jnp.allclose(loss3, ref3, rtol=1e-5, atol=1e-6), (loss3, ref3)

    # TODO(synk): backward pass / requires_grad_ is a PyTorch autograd flag;
    # only the forward value is implemented here.
    print("KERNEL_OK")
</pallas_src>

<mosaic_0001>
module attributes {stable_mosaic.version = 11 : i64} {
  func.func @_charbonnier_kernel(%arg0: i32, %arg1: i32, %arg2: memref<16x128xf32, #tpu.memory_space<vmem>>, %arg3: memref<16x128xf32, #tpu.memory_space<vmem>>, %arg4: memref<1x1x128xf32, #tpu.memory_space<vmem>>) attributes {dimension_semantics = [#tpu.dimension_semantics<parallel>, #tpu.dimension_semantics<arbitrary>], iteration_bounds = array<i64: 2, 1>, scalar_prefetch = 0 : i64, scratch_operands = 0 : i64, tpu.core_type = #tpu.core_type<tc>, window_params = [{transform_indices = @transform_0, window_bounds = array<i64: 16, 128>}, {transform_indices = @transform_1, window_bounds = array<i64: 16, 128>}, {transform_indices = @transform_2, window_bounds = array<i64: 1, 1, 128>}]} {
    %c1_i32 = arith.constant 1 : i32
    %0 = arith.muli %arg0, %c1_i32 : i32
    %1 = arith.addi %0, %arg1 : i32
    %c0_i32 = arith.constant 0 : i32
    %2 = arith.cmpi eq, %arg1, %c0_i32 : i32
    %3 = arith.extui %2 : i1 to i32
    %c0_i32_0 = arith.constant 0 : i32
    %4 = arith.cmpi ne, %3, %c0_i32_0 : i32
    scf.if %4 {
      %cst_6 = arith.constant 0.000000e+00 : f32
      %15 = vector.broadcast %cst_6 : f32 to vector<1x1x128xf32>
      %c0_7 = arith.constant 0 : index
      %c0_8 = arith.constant 0 : index
      %c0_9 = arith.constant 0 : index
      %16 = vector.load %arg4[%c0_7, %c0_8, %c0_9] : memref<1x1x128xf32, #tpu.memory_space<vmem>>, vector<1x1x128xf32>
      tpu.vector_store %arg4[%c0_7, %c0_8, %c0_9], %15 {strides = array<i32>} : memref<1x1x128xf32, #tpu.memory_space<vmem>>, vector<1x1x128xf32>,
    } else {
    }
    %c0 = arith.constant 0 : index
    %c0_1 = arith.constant 0 : index
    %5 = vector.load %arg2[%c0, %c0_1] : memref<16x128xf32, #tpu.memory_space<vmem>>, vector<16x128xf32>
    %c0_2 = arith.constant 0 : index
    %c0_3 = arith.constant 0 : index
    %6 = vector.load %arg3[%c0_2, %c0_3] : memref<16x128xf32, #tpu.memory_space<vmem>>, vector<16x128xf32>
    %7 = arith.subf %5, %6 : vector<16x128xf32>
    %8 = arith.mulf %7, %7 : vector<16x128xf32>
    %cst = arith.constant 9.99999997E-7 : f32
    %9 = vector.broadcast %cst : f32 to vector<16x128xf32>
    %10 = arith.addf %8, %9 : vector<16x128xf32>
    %11 = math.sqrt %10 : vector<16x128xf32>
    %c1_i32_4 = arith.constant 1 : i32
    %12 = arith.cmpi slt, %1, %c1_i32_4 : i32
    %13 = arith.extui %12 : i1 to i32
    %c0_i32_5 = arith.constant 0 : i32
    %14 = arith.cmpi ne, %13, %c0_i32_5 : i32
    scf.if %14 {
      %c0_6 = arith.constant 0 : index
      %c0_7 = arith.constant 0 : index
      %c0_8 = arith.constant 0 : index
      %15 = vector.load %arg4[%c0_6, %c0_7, %c0_8] : memref<1x1x128xf32, #tpu.memory_space<vmem>>, vector<1x1x128xf32>
      %cst_9 = arith.constant dense<0.000000e+00> : vector<128xf32>
      %16 = vector.multi_reduction <add>, %11, %cst_9 [0] : vector<16x128xf32> to vector<128xf32>
      %17 = vector.shape_cast %16 : vector<128xf32> to vector<1x128xf32>
      %18 = vector.shape_cast %17 : vector<1x128xf32> to vector<1x1x128xf32>
      %19 = arith.addf %15, %18 : vector<1x1x128xf32>
      %c0_10 = arith.constant 0 : index
      %c0_11 = arith.constant 0 : index
      %c0_12 = arith.constant 0 : index
      %20 = vector.load %arg4[%c0_10, %c0_11, %c0_12] : memref<1x1x128xf32, #tpu.memory_space<vmem>>, vector<1x1x128xf32>
      tpu.vector_store %arg4[%c0_10, %c0_11, %c0_12], %19 {strides = array<i32>} : memref<1x1x128xf32, #tpu.memory_space<vmem>>, vector<1x1x128xf32>,
    } else {
    }
    return
  }
  func.func @transform_0(%arg0: i32, %arg1: i32) -> (i32, i32) {
    %c1_i32 = arith.constant 1 : i32
    %0 = arith.muli %arg0, %c1_i32 : i32
    %1 = arith.addi %0, %arg1 : i32
    %c0_i32 = arith.constant 0 : i32
    %2 = arith.minsi %1, %c0_i32 : i32
    %c0_i32_0 = arith.constant 0 : i32
    %c0_i32_1 = arith.constant 0 : i32
    return %2, %c0_i32_0 : i32, i32
  }
  func.func @transform_1(%arg0: i32, %arg1: i32) -> (i32, i32) {
    %c1_i32 = arith.constant 1 : i32
    %0 = arith.muli %arg0, %c1_i32 : i32
    %1 = arith.addi %0, %arg1 : i32
    %c0_i32 = arith.constant 0 : i32
    %2 = arith.minsi %1, %c0_i32 : i32
    %c0_i32_0 = arith.constant 0 : i32
    %c0_i32_1 = arith.constant 0 : i32
    return %2, %c0_i32_0 : i32, i32
  }
  func.func @transform_2(%arg0: i32, %arg1: i32) -> (i32, i32, i32) {
    %c0_i32 = arith.constant 0 : i32
    %c0_i32_0 = arith.constant 0 : i32
    %c0_i32_1 = arith.constant 0 : i32
    return %arg0, %c0_i32, %c0_i32_0 : i32, i32, i32
  }
}

</mosaic_0001>

<llo_original>
// kernel: charbonnier_loss.1
$region0: #{charbonnier_loss.1}
  #allocation0 [shape = 'u32[]', space=smem, size = 0x4, offset = 0x4, fixed_abs, tag = 'smem constant byte address 0x4 - core index']
  #allocation1 [shape = 'u32[72,128]{1,0:T(1,128)}', space=vmem, size = 0x9000, scoped, tag = 'internal scratch']
  %s0 = inlined_call_operand.vmem [shape: f32[16,128], index: 0, kind: input, shape index: {}]
  %s1 = inlined_call_operand.vmem [shape: f32[16,128], index: 1, kind: input, shape index: {}]
  %s2 = inlined_call_operand.vmem [shape: f32[2,1,128], index: 2, kind: output, shape index: {}]
  %s3 = sld [smem:[#allocation0]]
  $region49: #{charbonnier_loss.1} parent=0
    _
  %s5 = ssub.s32 1, %s3
  %s6 = scalar_select 0, %s5, %s3
  loop: start=0, step=1, limit=4
  $region2: #{charbonnier_loss.1} parent=0 // loop_pre_header
    _
  $region3: #{charbonnier_loss.1} parent=0 // loop_header
    %s8 = sphi 0, %s12
    %p9 = scmp.ge.s32.totalorder %s8, 4
    %s15 = sphi 0, %s27
    %s16 = sphi 0, %s23
    %s17 = sphi 0, %s15
    %s18 = sphi 0, %s16
    %s19 = sphi 0, %s17
    %s20 = sphi 0, %s18
    %s36 = sphi 0, %s38
    %s39 = sphi 0, %s36
    %s40 = sphi 0, %s39
    %s56 = sphi 0, %s40
    %s68 = sphi 0, %s70
    %s71 = sphi 0, %s68
    %s72 = sphi 0, %s71
    %s88 = sphi 0, %s72
    %s94 = sphi 0, %s96
    %s97 = sphi 0, %s94
    %s98 = sphi 0, %s97
    %s114 = sphi 0, %s98
  $region4: #{charbonnier_loss.1} parent=0 // loop_header_branch
    %11 = sbr.rel (%p9) target = $region8
  $region5: #{charbonnier_loss.1} parent=0 // loop_body
    %s13 = ssub.s32 %s8, 1
    %s14 = ssub.s32 %s8, 2
    %s21 = sadd.s32 1, %s16
    %p22 = scmp.ge.s32.totalorder %s21, 1
    %s23 = scalar_select %p22, 0, %s21
    %s24 = sadd.s32 1, %s15
    %s25 = scalar_select %p22, %s24, %s15
    %p26 = scmp.ge.s32.totalorder %s25, 2
    %s27 = scalar_select %p26, 0, %s25
    %s28 = sadd.s32 %s15, %s16
    %p29 = scmp.lt.s32.totalorder %s28, 0
    %s30 = scalar_select %p29, %s28, 0
    %s31 = sadd.s32 %s27, %s23
    %p32 = scmp.lt.s32.totalorder %s31, 0
    %s33 = scalar_select %p32, %s31, 0
    %s34 = ssub.s32 %s30, %s33
    %p35 = scmp.eq.s32.totalorder %s34, 0
    %s37 = sadd.s32 %s36, 1
    %s38 = scalar_select %p35, %s36, %s37
    %p41 = pneg %p35
    %p42 = scmp.eq.s32.totalorder %s8, 1
    %p43 = por %p41, %p42
    %p44 = scmp.ne.s32.totalorder %s36, %s39
    %p45 = scmp.eq.s32.totalorder %s8, 0
    %p46 = por %p44, %p45
    %p47 = scmp.ne.s32.totalorder %s36, %s39
    %p48 = scmp.eq.s32.totalorder %s13, 1
    %p49 = por %p47, %p48
    %p50 = scmp.ne.s32.totalorder %s39, %s40
    %p51 = scmp.eq.s32.totalorder %s13, 0
    %p52 = por %p50, %p51
    %p53 = scmp.ne.s32.totalorder %s39, %s40
    %p54 = scmp.eq.s32.totalorder %s14, 1
    %p55 = por %p53, %p54
    %p57 = scmp.ne.s32.totalorder %s40, %s56
    %p58 = scmp.eq.s32.totalorder %s14, 0
    %p59 = por %p57, %p58
    %s60 = sadd.s32 %s15, %s16
    %p61 = scmp.lt.s32.totalorder %s60, 0
    %s62 = scalar_select %p61, %s60, 0
    %s63 = sadd.s32 %s27, %s23
    %p64 = scmp.lt.s32.totalorder %s63, 0
    %s65 = scalar_select %p64, %s63, 0
    %s66 = ssub.s32 %s62, %s65
    %p67 = scmp.eq.s32.totalorder %s66, 0
    %s69 = sadd.s32 %s68, 1
    %s70 = scalar_select %p67, %s68, %s69
    %p73 = pneg %p67
    %p74 = scmp.eq.s32.totalorder %s8, 1
    %p75 = por %p73, %p74
    %p76 = scmp.ne.s32.totalorder %s68, %s71
    %p77 = scmp.eq.s32.totalorder %s8, 0
    %p78 = por %p76, %p77
    %p79 = scmp.ne.s32.totalorder %s68, %s71
    %p80 = scmp.eq.s32.totalorder %s13, 1
    %p81 = por %p79, %p80
    %p82 = scmp.ne.s32.totalorder %s71, %s72
    %p83 = scmp.eq.s32.totalorder %s13, 0
    %p84 = por %p82, %p83
    %p85 = scmp.ne.s32.totalorder %s71, %s72
    %p86 = scmp.eq.s32.totalorder %s14, 1
    %p87 = por %p85, %p86
    %p89 = scmp.ne.s32.totalorder %s72, %s88
    %p90 = scmp.eq.s32.totalorder %s14, 0
    %p91 = por %p89, %p90
    %s92 = ssub.s32 %s15, %s27
    %p93 = scmp.eq.s32.totalorder %s92, 0
    %s95 = sadd.s32 %s94, 1
    %s96 = scalar_select %p93, %s94, %s95
    %p99 = pneg %p93
    %p100 = scmp.eq.s32.totalorder %s8, 1
    %p101 = por %p99, %p100
    %p102 = scmp.ne.s32.totalorder %s94, %s97
    %p103 = scmp.eq.s32.totalorder %s8, 0
    %p104 = por %p102, %p103
    %p105 = scmp.ne.s32.totalorder %s94, %s97
    %p106 = scmp.eq.s32.totalorder %s13, 1
    %p107 = por %p105, %p106
    %p108 = scmp.ne.s32.totalorder %s97, %s98
    %p109 = scmp.eq.s32.totalorder %s13, 0
    %p110 = por %p108, %p109
    %p111 = scmp.ne.s32.totalorder %s97, %s98
    %p112 = scmp.eq.s32.totalorder %s14, 1
    %p113 = por %p111, %p112
    %p115 = scmp.ne.s32.totalorder %s98, %s114
    %p116 = scmp.eq.s32.totalorder %s14, 0
    %p117 = por %p115, %p116
    %p118 = scmp.le.s32.totalorder 1, %s8
    %p119 = scmp.lt.s32.totalorder %s8, 3
    %p120 = pnand %p118, %p119
    %p121 = pneg %p120
    // Predicated region
    $region9: #{charbonnier_loss.1} parent=5 // pred_check
      _
    $region10: #{charbonnier_loss.1} parent=5 // pred_check_branch
      %123 = sbr.rel (%p120) target = $region12
    $region11: #{charbonnier_loss.1} parent=5 // pred_region
      %s124 = ssub.s32 %s8, 1
    $region12: #{charbonnier_loss.1} parent=5 // pred_fallthru
      _
    %p125 = scmp.lt.s32.totalorder %s8, 2
    // Predicated region
    $region13: #{charbonnier_loss.1} parent=5 // pred_check
      %p126 = pneg %p125
    $region14: #{charbonnier_loss.1} parent=5 // pred_check_branch
      %128 = sbr.rel (%p126) target = $region16
    $region15: #{charbonnier_loss.1} parent=5 // pred_region
      // Predicated region
      $region17: #{charbonnier_loss.1} parent=15 // pred_check
        %p129 = pneg %p46
      $region18: #{charbonnier_loss.1} parent=15 // pred_check_branch
        %131 = sbr.rel (%p129) target = $region20
      $region19: #{charbonnier_loss.1} parent=15 // pred_region
        %s132 = sadd.s32 %s15, %s16
        %p133 = scmp.lt.s32.totalorder %s132, 0
        %s134 = scalar_select %p133, %s132, 0
        %s135 = smul.u32 2, %s134
        %p136 = scmp.lt.s32.totalorder %s135, 1
        %s137 = scalar_select %p136, %s135, 1
        %s138 = smul.addr %s137, 8
        %s139 = scalar_lea.vmem %s0, %s138
        %s140 = sadd.s32 %s15, %s16
        %p141 = scmp.lt.s32.totalorder %s140, 0
        %s142 = scalar_select %p141, %s140, 0
        %s143 = smul.u32 2, %s142
      $region20: #{charbonnier_loss.1} parent=15 // pred_fallthru
        _
      // Predicated region
      $region21: #{charbonnier_loss.1} parent=15 // pred_check
        %p144 = pneg %p78
      $region22: #{charbonnier_loss.1} parent=15 // pred_check_branch
        %146 = sbr.rel (%p144) target = $region24
      $region23: #{charbonnier_loss.1} parent=15 // pred_region
        %s147 = sadd.s32 %s15, %s16
        %p148 = scmp.lt.s32.totalorder %s147, 0
        %s149 = scalar_select %p148, %s147, 0
        %s150 = smul.u32 2, %s149
        %p151 = scmp.lt.s32.totalorder %s150, 1
        %s152 = scalar_select %p151, %s150, 1
        %s153 = smul.addr %s152, 8
        %s154 = scalar_lea.vmem %s1, %s153
        %s155 = sadd.s32 %s15, %s16
        %p156 = scmp.lt.s32.totalorder %s155, 0
        %s157 = scalar_select %p156, %s155, 0
        %s158 = smul.u32 2, %s157
      $region24: #{charbonnier_loss.1} parent=15 // pred_fallthru
        _
    $region16: #{charbonnier_loss.1} parent=5 // pred_fallthru
      _
    %p159 = scmp.le.s32.totalorder 1, %s8
    %p160 = scmp.lt.s32.totalorder %s8, 3
    %p161 = pnand %p159, %p160
    %p162 = pneg %p161
    // Predicated region
    $region25: #{charbonnier_loss.1} parent=5 // pred_check
      _
    $region26: #{charbonnier_loss.1} parent=5 // pred_check_branch
      %164 = sbr.rel (%p161) target = $region28
    $region27: #{charbonnier_loss.1} parent=5 // pred_region
      %s165 = ssub.s32 %s8, 1
      %s166 = sadd.s32 %s17, %s18
      %p167 = scmp.lt.s32.totalorder %s166, 0
      %s168 = scalar_select %p167, %s166, 0
      %s169 = smul.u32 2, %s168
      %p170 = scmp.lt.s32.totalorder %s169, 1
      %s171 = scalar_select %p170, %s169, 1
      %s172 = smul.addr %s171, 8
      %s173 = scalar_lea.vmem %s0, %s172
      %p174 = pneg %p52
      %p175 = pneg %p49
      %s176 = sadd.s32 %s17, %s18
      %p177 = scmp.lt.s32.totalorder %s176, 0
      %s178 = scalar_select %p177, %s176, 0
      %s179 = smul.u32 2, %s178
      %p180 = scmp.lt.s32.totalorder %s179, 1
      %s181 = scalar_select %p180, %s179, 1
      %s182 = smul.addr %s181, 8
      %s183 = scalar_lea.vmem %s1, %s182
      %p184 = pneg %p84
      %p185 = pneg %p81
      %p186 = pneg %p110
      %p187 = pneg %p107
      %p188 = scmp.lt.s32.totalorder %s17, 1
      %s189 = scalar_select %p188, %s17, 1
      %s190 = scalar_lea.vmem %s2, %s189
      %s191 = sadd.s32 %s17, %s18
      %p192 = scmp.lt.s32.totalorder %s191, 0
      %s193 = scalar_select %p192, %s191, 0
      %s194 = smul.u32 2, %s193
      %p195 = scmp.lt.s32.totalorder %s194, 1
      %s196 = scalar_select %p195, %s194, 1
      %s197 = smul.addr %s196, 8
      %s198 = scalar_lea.vmem %s0, %s197
      %s199 = sadd.s32 %s17, %s18
      %p200 = scmp.lt.s32.totalorder %s199, 0
      %s201 = scalar_select %p200, %s199, 0
      %s202 = smul.u32 2, %s201
      %s203 = sadd.s32 %s17, %s18
      %p204 = scmp.lt.s32.totalorder %s203, 0
      %s205 = scalar_select %p204, %s203, 0
      %s206 = smul.u32 2, %s205
      %p207 = scmp.lt.s32.totalorder %s206, 1
      %s208 = scalar_select %p207, %s206, 1
      %s209 = smul.addr %s208, 8
      %s210 = scalar_lea.vmem %s1, %s209
      %s211 = sadd.s32 %s17, %s18
      %p212 = scmp.lt.s32.totalorder %s211, 0
      %s213 = scalar_select %p212, %s211, 0
      %s214 = smul.u32 2, %s213
      %p215 = scmp.lt.s32.totalorder %s17, 1
      %s216 = scalar_select %p215, %s17, 1
      %s217 = scalar_lea.vmem %s2, %s216
      %s218 = sadd.s32 %s17, %s18
      %p219 = scmp.eq.s32.totalorder %s18, 0
      // Predicated region
      $region29: #{charbonnier_loss.1} parent=27 // pred_check
        %p220 = pneg %p219
      $region30: #{charbonnier_loss.1} parent=27 // pred_check_branch
        %222 = sbr.rel (%p220) target = $region32
      $region31: #{charbonnier_loss.1} parent=27 // pred_region
        %223 = vst [vmem:[%s217] sm:$0x1] 0.0
      $region32: #{charbonnier_loss.1} parent=27 // pred_fallthru
        _
      %v224 = vld [vmem:[%s198] sm:$0xff]
      %v225 = vld [vmem:[%s198 + $0x8] sm:$0xff]
      %v226 = vld [vmem:[%s210] sm:$0xff]
      %v227 = vld [vmem:[%s210 + $0x8] sm:$0xff]
      %v228 = vsub.f32 %v224, %v226
      %v229 = vsub.f32 %v225, %v227
      %v230 = vmul.f32 %v228, %v228
      %v231 = vmul.f32 %v229, %v229
      %v232 = vadd.f32 %v230, 1e-06
      %v233 = vadd.f32 %v231, 1e-06
      %v234 = vrsqrt.pop %v232
      %v235 = vmul.f32 %v234, %v232
      %v236 = vmul.f32 %v235, %v234
      %v237 = vmul.f32 0.5, %v236
      %v238 = vsub.f32 1.5, %v237
      %v239 = vmul.f32 %v234, %v238
      %v240 = vmul.f32 %v232, %v239
      %vm241 = vcmp.eq.f32.partialorder %v232, inf
      %v242 = vsel %vm241, %v232, %v240
      %vm243 = vcmp.eq.f32.partialorder %v232, 0.0
      %v244 = vand.u32 %v232, 2147483648
      %v245 = vsel %vm243, %v244, %v242
      %v246 = vrsqrt.pop %v233
      %v247 = vmul.f32 %v246, %v233
      %v248 = vmul.f32 %v247, %v246
      %v249 = vmul.f32 0.5, %v248
      %v250 = vsub.f32 1.5, %v249
      %v251 = vmul.f32 %v246, %v250
      %v252 = vmul.f32 %v233, %v251
      %vm253 = vcmp.eq.f32.partialorder %v233, inf
      %v254 = vsel %vm253, %v233, %v252
      %vm255 = vcmp.eq.f32.partialorder %v233, 0.0
      %v256 = vand.u32 %v233, 2147483648
      %v257 = vsel %vm255, %v256, %v254
      %p258 = scmp.lt.s32.totalorder %s218, 1
      // Predicated region
      $region33: #{charbonnier_loss.1} parent=27 // pred_check
        %p259 = pneg %p258
      $region34: #{charbonnier_loss.1} parent=27 // pred_check_branch
        %261 = sbr.rel (%p259) target = $region36
      $region35: #{charbonnier_loss.1} parent=27 // pred_region
        %v262 = vld [vmem:[%s217] sm:$0x1]
        %v263 = vadd.f32 %v245, %v257
        %v264 = vrot.slane %v263, 4
        %v265 = vadd.f32 %v263, %v264
        %v266 = vrot.slane %v265, 2
        %v267 = vadd.f32 %v265, %v266
        %v268 = vrot.slane %v267, 1
        %v269 = vadd.f32 %v267, %v268
        %v270 = vadd.f32 %v262, %v269
        %271 = vst [vmem:[%s217] sm:$0x1] %v270
      $region36: #{charbonnier_loss.1} parent=27 // pred_fallthru
        _
      %p272 = scmp.lt.s32.totalorder %s17, 1
      %s273 = scalar_select %p272, %s17, 1
      %s274 = scalar_lea.vmem %s2, %s273
      // Predicated region
      $region37: #{charbonnier_loss.1} parent=27 // pred_check
        %p275 = pneg %p107
      $region38: #{charbonnier_loss.1} parent=27 // pred_check_branch
        %277 = sbr.rel (%p275) target = $region40
      $region39: #{charbonnier_loss.1} parent=27 // pred_region
        _
      $region40: #{charbonnier_loss.1} parent=27 // pred_fallthru
        _
    $region28: #{charbonnier_loss.1} parent=5 // pred_fallthru
      _
    %p278 = scmp.le.s32.totalorder 2, %s8
    // Predicated region
    $region41: #{charbonnier_loss.1} parent=5 // pred_check
      %p279 = pneg %p278
    $region42: #{charbonnier_loss.1} parent=5 // pred_check_branch
      %281 = sbr.rel (%p279) target = $region44
    $region43: #{charbonnier_loss.1} parent=5 // pred_region
      %s282 = ssub.s32 %s8, 2
      // Predicated region
      $region45: #{charbonnier_loss.1} parent=43 // pred_check
        %p283 = pneg %p113
      $region46: #{charbonnier_loss.1} parent=43 // pred_check_branch
        %285 = sbr.rel (%p283) target = $region48
      $region47: #{charbonnier_loss.1} parent=43 // pred_region
        %p286 = scmp.lt.s32.totalorder %s19, 1
        %s287 = scalar_select %p286, %s19, 1
        %s288 = scalar_lea.vmem %s2, %s287
      $region48: #{charbonnier_loss.1} parent=43 // pred_fallthru
        _
    $region44: #{charbonnier_loss.1} parent=5 // pred_fallthru
      _
  $region6: #{charbonnier_loss.1} parent=0 // loop_footer
    %s12 = sadd.s32 1, %s8
  $region7: #{charbonnier_loss.1} parent=0 // loop_footer_branch
    %7 = sbr.rel target = $region3
  $region8: #{charbonnier_loss.1} parent=0 // loop_exit
    _

</llo_original>
